<compile_context>
chip_gen: v5e
topology: v5e:2x2
jax: 0.10.0
libtpu: 0.0.40
codegen_flags: <defaults>
</compile_context>

<pallas_src>
import jax
import jax.numpy as jnp
from jax.experimental import pallas as pl
from jax.experimental.pallas import tpu as pltpu

LANE = 128      # lane width of a vreg (last dim)
SUBLANE = 8     # sublane granularity (second-to-last dim)


def _round_up(a, m):
    return ((a + m - 1) // m) * m


def mlp_kernel(x_ref, w1_ref, b1_ref, w2_ref, b2_ref, w3_ref, b3_ref, o_ref):
    """One batch tile: all three matmuls + ReLUs fused; intermediates stay in
    vregs/VMEM and never touch HBM."""
    cdt = w1_ref.dtype            # matmul operand dtype (f32 or bf16)
    x = x_ref[...].astype(cdt)    # in-kernel cast: no extra wrapper HBM pass

    # MXU matmuls accumulate in f32; bias-add / ReLU run on the VPU in f32,
    # casting back to the storage dtype only at the next MXU input.
    h1 = jnp.dot(x, w1_ref[...], preferred_element_type=jnp.float32)
    h1 = jnp.maximum(h1 + b1_ref[...], 0.0).astype(cdt)

    h2 = jnp.dot(h1, w2_ref[...], preferred_element_type=jnp.float32)
    h2 = jnp.maximum(h2 + b2_ref[...], 0.0).astype(cdt)

    out = jnp.dot(h2, w3_ref[...], preferred_element_type=jnp.float32) + b3_ref[...]
    o_ref[...] = out.astype(o_ref.dtype)


def linear2_qnet_forward(x, params, *, batch_tile=2048, core_parallel=False):
    """Fused forward pass of Linear2_QNet.

    x: [B, input_size] float32 (cast to the weights' dtype inside the kernel)
    params: dict with w1 [in,h1], b1 [1,h1], w2 [h1,h2], b2 [1,h2],
            w3 [h2,out], b3 [1,out]; biases float32, weights f32 or bf16.
    batch_tile: rows per grid step (rounded up to the 8-row sublane grain).
    core_parallel: v7x only -- keep >=2 grid steps and mark the batch axis
                   CORE_PARALLEL so both TensorCores are used.
    """
    w1, b1 = params["w1"], params["b1"]
    w2, b2 = params["w2"], params["b2"]
    w3, b3 = params["w3"], params["b3"]

    B, in_size = x.shape
    h1_size = w1.shape[1]
    h2_size = w2.shape[1]
    out_size = w3.shape[1]

    # Batch tiling: tile must be a multiple of the 8-row sublane granularity
    # (else the (tb, *) block violates the (8,128) rule); never exceed the
    # 8-rounded batch itself.
    tb = min(_round_up(max(batch_tile, SUBLANE), SUBLANE), _round_up(B, SUBLANE))
    if core_parallel:
        # Both v7x TensorCores only engage if there are >= 2 grid steps.
        tb = min(tb, _round_up(pl.cdiv(_round_up(B, SUBLANE), 2), SUBLANE))
    b_pad = _round_up(B, tb)
    if b_pad != B:
        x = jnp.pad(x, ((0, b_pad - B), (0, 0)))

    grid = (b_pad // tb,)

    def tiled(shape):
        # block indexed by the batch-tile grid position
        return pl.BlockSpec(shape, lambda i: (i, 0))

    def whole(arr):
        # whole array as one resident block (weights / biases)
        return pl.BlockSpec(arr.shape, lambda i: (0, 0))

    if core_parallel:
        semantics = (getattr(pltpu, "CORE_PARALLEL", "parallel"),)
    else:
        semantics = ("parallel",)

    flops = 2 * b_pad * (in_size * h1_size + h1_size * h2_size + h2_size * out_size)
    bytes_accessed = (
        x.size * x.dtype.itemsize
        + b_pad * out_size * 4
        + sum(a.size * a.dtype.itemsize for a in (w1, b1, w2, b2, w3, b3))
    )

    y_full = pl.pallas_call(
        mlp_kernel,
        out_shape=jax.ShapeDtypeStruct((b_pad, out_size), jnp.float32),
        grid=grid,
        in_specs=[
            tiled((tb, in_size)),          # x: pipelined per batch tile
            whole(w1), whole(b1),          # weights/biases: resident
            whole(w2), whole(b2),
            whole(w3), whole(b3),
        ],
        out_specs=tiled((tb, out_size)),   # unpadded output block (last dim = full dim)
        compiler_params=pltpu.CompilerParams(dimension_semantics=semantics),
        cost_estimate=pl.CostEstimate(
            flops=flops, transcendentals=0, bytes_accessed=bytes_accessed),
    )(x, w1, b1, w2, b2, w3, b3)

    return y_full[:B] if b_pad != B else y_full


# ----------------------------------------------------------------------------
# One-time parameter preparation (done at init time, NOT per forward call).
# ----------------------------------------------------------------------------
def init_params(key, input_size, hidden1, hidden2, output_size):
    """PyTorch nn.Linear default init: U(-1/sqrt(fan_in), 1/sqrt(fan_in)).
    Weights stored transposed: [in, out]; biases as [1, out]."""
    def one_layer(k, fan_in, fan_out):
        kw, kb = jax.random.split(k)
        bound = 1.0 / jnp.sqrt(fan_in)
        w = jax.random.uniform(kw, (fan_in, fan_out), jnp.float32, -bound, bound)
        b = jax.random.uniform(kb, (1, fan_out), jnp.float32, -bound, bound)
        return w, b

    k1, k2, k3 = jax.random.split(key, 3)
    w1, b1 = one_layer(k1, input_size, hidden1)
    w2, b2 = one_layer(k2, hidden1, hidden2)
    w3, b3 = one_layer(k3, hidden2, output_size)
    return {"w1": w1, "b1": b1, "w2": w2, "b2": b2, "w3": w3, "b3": b3}


def cast_weights(params, dtype):
    """One-time cast of the matmul weights to a storage/compute dtype (e.g.
    bf16) -- halves weight/x-operand VMEM traffic.  Biases stay f32 so the
    VPU bias-add / ReLU path is f32 on every chip generation."""
    out = dict(params)
    for k in ("w1", "w2", "w3"):
        out[k] = params[k].astype(dtype)
    return out


def pad_hidden_lane_dense(params, lane=LANE):
    """One-time zero-padding of the hidden dims up to a multiple of 128 lanes
    so intermediates are lane-dense (no masked layouts / relayout ops).
    Numerically exact: padded h1/h2 lanes are ReLU(0 + 0) = 0 and the
    corresponding extra w2/w3 rows are zero, so they contribute nothing."""
    w1, b1 = params["w1"], params["b1"]
    w2, b2 = params["w2"], params["b2"]
    w3, b3 = params["w3"], params["b3"]
    h1, h2 = w1.shape[1], w2.shape[1]
    h1p, h2p = _round_up(h1, lane), _round_up(h2, lane)
    w1 = jnp.pad(w1, ((0, 0), (0, h1p - h1)))
    b1 = jnp.pad(b1, ((0, 0), (0, h1p - h1)))
    w2 = jnp.pad(w2, ((0, h1p - h1), (0, h2p - h2)))
    b2 = jnp.pad(b2, ((0, 0), (0, h2p - h2)))
    w3 = jnp.pad(w3, ((0, h2p - h2), (0, 0)))
    return {"w1": w1, "b1": b1, "w2": w2, "b2": b2, "w3": w3, "b3": b3}


def reference_forward(x, p):
    h1 = jnp.maximum(x @ p["w1"] + p["b1"], 0.0)
    h2 = jnp.maximum(h1 @ p["w2"] + p["b2"], 0.0)
    return h2 @ p["w3"] + p["b3"]


if __name__ == "__main__":
    # Shapes consistent with a typical Q-network: in=16, h1=h2=32, out=4.
    INPUT, H1, H2, OUT = 16, 32, 32, 4

    key = jax.random.PRNGKey(0)
    kx, kp, kx2 = jax.random.split(key, 3)
    params = init_params(kp, INPUT, H1, H2, OUT)

    # 1) Small batch, float32 path (tight tolerance).
    x_small = jax.random.normal(kx, (8, INPUT), jnp.float32)
    y_small = jax.block_until_ready(linear2_qnet_forward(x_small, params))
    y_ref_small = reference_forward(x_small, params)
    assert y_small.shape == (8, OUT), y_small.shape
    assert jnp.allclose(y_small, y_ref_small, atol=1e-5, rtol=1e-5), \
        "f32 mismatch vs. JAX reference"

    # 2) Larger, non-multiple-of-8 batch; weights pre-cast to bf16 once and
    #    hidden dims lane-padded once (both are init-time transforms).
    params_tpu = pad_hidden_lane_dense(cast_weights(params, jnp.bfloat16))
    x_big = jax.random.normal(kx2, (1000, INPUT), jnp.float32)
    y_big = jax.block_until_ready(
        linear2_qnet_forward(x_big, params_tpu, batch_tile=2048))
    y_ref_big = reference_forward(x_big, params)
    assert y_big.shape == (1000, OUT), y_big.shape
    assert jnp.allclose(y_big, y_ref_big, atol=5e-2, rtol=5e-2), \
        "bf16 mismatch vs. JAX reference"

    # 3) Batch-tiled pipeline path (multiple grid steps), f32 weights.
    x_tiles = jax.random.normal(kx2, (4096, INPUT), jnp.float32)
    y_tiles = jax.block_until_ready(
        linear2_qnet_forward(x_tiles, params, batch_tile=2048))
    y_ref_tiles = reference_forward(x_tiles, params)
    assert jnp.allclose(y_tiles, y_ref_tiles, atol=1e-5, rtol=1e-5), \
        "tiled f32 mismatch vs. JAX reference"

    # On v7x, call with core_parallel=True to shard batch tiles across both
    # TensorCores (pltpu.CORE_PARALLEL); left off here so the default-backend
    # run stays clean on single-TC v5e/v6e.

    # TODO(synk): Linear2_QNet.save/load are torch checkpoint file I/O — host
    # utilities with no kernel equivalent; omitted.
    print("KERNEL_OK")
</pallas_src>

<mosaic_0001>
module attributes {stable_mosaic.version = 11 : i64} {
  func.func @mlp_kernel(%arg0: i32, %arg1: memref<8x16xf32, #tpu.memory_space<vmem>>, %arg2: memref<16x32xf32, #tpu.memory_space<vmem>>, %arg3: memref<1x32xf32, #tpu.memory_space<vmem>>, %arg4: memref<32x32xf32, #tpu.memory_space<vmem>>, %arg5: memref<1x32xf32, #tpu.memory_space<vmem>>, %arg6: memref<32x4xf32, #tpu.memory_space<vmem>>, %arg7: memref<1x4xf32, #tpu.memory_space<vmem>>, %arg8: memref<8x4xf32, #tpu.memory_space<vmem>>) attributes {dimension_semantics = [#tpu.dimension_semantics<parallel>], iteration_bounds = array<i64: 1>, scalar_prefetch = 0 : i64, scratch_operands = 0 : i64, tpu.core_type = #tpu.core_type<tc>, window_params = [{transform_indices = @transform_0, window_bounds = array<i64: 8, 16>}, {pipeline_mode = #tpu.pipeline_mode<synchronous>, transform_indices = @transform_1, window_bounds = array<i64: 16, 32>}, {pipeline_mode = #tpu.pipeline_mode<synchronous>, transform_indices = @transform_2, window_bounds = array<i64: 1, 32>}, {pipeline_mode = #tpu.pipeline_mode<synchronous>, transform_indices = @transform_3, window_bounds = array<i64: 32, 32>}, {pipeline_mode = #tpu.pipeline_mode<synchronous>, transform_indices = @transform_4, window_bounds = array<i64: 1, 32>}, {pipeline_mode = #tpu.pipeline_mode<synchronous>, transform_indices = @transform_5, window_bounds = array<i64: 32, 4>}, {pipeline_mode = #tpu.pipeline_mode<synchronous>, transform_indices = @transform_6, window_bounds = array<i64: 1, 4>}, {transform_indices = @transform_7, window_bounds = array<i64: 8, 4>}]} {
    %c0 = arith.constant 0 : index
    %c0_0 = arith.constant 0 : index
    %0 = vector.load %arg1[%c0, %c0_0] : memref<8x16xf32, #tpu.memory_space<vmem>>, vector<8x16xf32>
    %c0_1 = arith.constant 0 : index
    %c0_2 = arith.constant 0 : index
    %1 = vector.load %arg2[%c0_1, %c0_2] : memref<16x32xf32, #tpu.memory_space<vmem>>, vector<16x32xf32>
    %cst = arith.constant dense<0.000000e+00> : vector<8x32xf32>
    %2 = tpu.matmul %0, %1, %cst {dimension_numbers = #tpu.dot_dimension_numbers<[1], [0], [0], [1], [0, 0, 1, 1], [], []>} : vector<8x16xf32>, vector<16x32xf32>, vector<8x32xf32> -> vector<8x32xf32>
    %c0_3 = arith.constant 0 : index
    %c0_4 = arith.constant 0 : index
    %3 = vector.load %arg3[%c0_3, %c0_4] : memref<1x32xf32, #tpu.memory_space<vmem>>, vector<1x32xf32>
    %4 = vector.broadcast %3 : vector<1x32xf32> to vector<8x32xf32>
    %5 = arith.addf %2, %4 : vector<8x32xf32>
    %cst_5 = arith.constant 0.000000e+00 : f32
    %6 = vector.broadcast %cst_5 : f32 to vector<8x32xf32>
    %7 = arith.maximumf %5, %6 : vector<8x32xf32>
    %c0_6 = arith.constant 0 : index
    %c0_7 = arith.constant 0 : index
    %8 = vector.load %arg4[%c0_6, %c0_7] : memref<32x32xf32, #tpu.memory_space<vmem>>, vector<32x32xf32>
    %cst_8 = arith.constant dense<0.000000e+00> : vector<8x32xf32>
    %9 = tpu.matmul %7, %8, %cst_8 {dimension_numbers = #tpu.dot_dimension_numbers<[1], [0], [0], [1], [0, 0, 1, 1], [], []>} : vector<8x32xf32>, vector<32x32xf32>, vector<8x32xf32> -> vector<8x32xf32>
    %c0_9 = arith.constant 0 : index
    %c0_10 = arith.constant 0 : index
    %10 = vector.load %arg5[%c0_9, %c0_10] : memref<1x32xf32, #tpu.memory_space<vmem>>, vector<1x32xf32>
    %11 = vector.broadcast %10 : vector<1x32xf32> to vector<8x32xf32>
    %12 = arith.addf %9, %11 : vector<8x32xf32>
    %cst_11 = arith.constant 0.000000e+00 : f32
    %13 = vector.broadcast %cst_11 : f32 to vector<8x32xf32>
    %14 = arith.maximumf %12, %13 : vector<8x32xf32>
    %c0_12 = arith.constant 0 : index
    %c0_13 = arith.constant 0 : index
    %15 = vector.load %arg6[%c0_12, %c0_13] : memref<32x4xf32, #tpu.memory_space<vmem>>, vector<32x4xf32>
    %cst_14 = arith.constant dense<0.000000e+00> : vector<8x4xf32>
    %16 = tpu.matmul %14, %15, %cst_14 {dimension_numbers = #tpu.dot_dimension_numbers<[1], [0], [0], [1], [0, 0, 1, 1], [], []>} : vector<8x32xf32>, vector<32x4xf32>, vector<8x4xf32> -> vector<8x4xf32>
    %c0_15 = arith.constant 0 : index
    %c0_16 = arith.constant 0 : index
    %17 = vector.load %arg7[%c0_15, %c0_16] : memref<1x4xf32, #tpu.memory_space<vmem>>, vector<1x4xf32>
    %18 = vector.broadcast %17 : vector<1x4xf32> to vector<8x4xf32>
    %19 = arith.addf %16, %18 : vector<8x4xf32>
    %c0_17 = arith.constant 0 : index
    %c0_18 = arith.constant 0 : index
    %20 = vector.load %arg8[%c0_17, %c0_18] : memref<8x4xf32, #tpu.memory_space<vmem>>, vector<8x4xf32>
    tpu.vector_store %arg8[%c0_17, %c0_18], %19 {strides = array<i32>} : memref<8x4xf32, #tpu.memory_space<vmem>>, vector<8x4xf32>,
    return
  }
  func.func @transform_0(%arg0: i32) -> (i32, i32) {
    %c0_i32 = arith.constant 0 : i32
    %c0_i32_0 = arith.constant 0 : i32
    return %arg0, %c0_i32 : i32, i32
  }
  func.func @transform_1(%arg0: i32) -> (i32, i32) {
    %c0_i32 = arith.constant 0 : i32
    %c0_i32_0 = arith.constant 0 : i32
    %c0_i32_1 = arith.constant 0 : i32
    return %c0_i32, %c0_i32_0 : i32, i32
  }
  func.func @transform_2(%arg0: i32) -> (i32, i32) {
    %c0_i32 = arith.constant 0 : i32
    %c0_i32_0 = arith.constant 0 : i32
    %c0_i32_1 = arith.constant 0 : i32
    return %c0_i32, %c0_i32_0 : i32, i32
  }
  func.func @transform_3(%arg0: i32) -> (i32, i32) {
    %c0_i32 = arith.constant 0 : i32
    %c0_i32_0 = arith.constant 0 : i32
    %c0_i32_1 = arith.constant 0 : i32
    return %c0_i32, %c0_i32_0 : i32, i32
  }
  func.func @transform_4(%arg0: i32) -> (i32, i32) {
    %c0_i32 = arith.constant 0 : i32
    %c0_i32_0 = arith.constant 0 : i32
    %c0_i32_1 = arith.constant 0 : i32
    return %c0_i32, %c0_i32_0 : i32, i32
  }
  func.func @transform_5(%arg0: i32) -> (i32, i32) {
    %c0_i32 = arith.constant 0 : i32
    %c0_i32_0 = arith.constant 0 : i32
    %c0_i32_1 = arith.constant 0 : i32
    return %c0_i32, %c0_i32_0 : i32, i32
  }
  func.func @transform_6(%arg0: i32) -> (i32, i32) {
    %c0_i32 = arith.constant 0 : i32
    %c0_i32_0 = arith.constant 0 : i32
    %c0_i32_1 = arith.constant 0 : i32
    return %c0_i32, %c0_i32_0 : i32, i32
  }
  func.func @transform_7(%arg0: i32) -> (i32, i32) {
    %c0_i32 = arith.constant 0 : i32
    %c0_i32_0 = arith.constant 0 : i32
    return %arg0, %c0_i32 : i32, i32
  }
}

</mosaic_0001>

<llo_original>
// kernel: tpu_custom_call.1
$region0: #{tpu_custom_call.1}
  #allocation0 [shape = 'u32[]', space=smem, size = 0x4, offset = 0x4, fixed_abs, tag = 'smem constant byte address 0x4 - core index']
  #allocation1 [shape = 'u32[72,128]{1,0:T(1,128)}', space=vmem, size = 0x9000, scoped, tag = 'internal scratch']
  %s0 = inlined_call_operand.hbm [shape: f32[8,16], index: 0, kind: input, shape index: {}]
  %s1 = inlined_call_operand.hbm [shape: f32[16,32], index: 1, kind: input, shape index: {}]
  %s2 = inlined_call_operand.vmem [shape: f32[1,32], index: 2, kind: input, shape index: {}]
  %s3 = inlined_call_operand.vmem [shape: f32[32,32], index: 3, kind: input, shape index: {}]
  %s4 = inlined_call_operand.vmem [shape: f32[1,32], index: 4, kind: input, shape index: {}]
  %s5 = inlined_call_operand.vmem [shape: f32[32,4], index: 5, kind: input, shape index: {}]
  %s6 = inlined_call_operand.vmem [shape: f32[1,4], index: 6, kind: input, shape index: {}]
  %s7 = inlined_call_operand.vmem [shape: f32[8,4], index: 7, kind: output, shape index: {}]
  %s8 = sld [smem:[#allocation0]]
  $region46: #{tpu_custom_call.1} parent=0
    _
  %s10 = ssub.s32 1, %s8
  %s11 = scalar_select 0, %s10, %s8
  $region1: #{tpu_custom_call.1} parent=0
    #allocation2 [shape = 'u8[4096]{0}', space=vmem, size = 0x1000, scoped, tag = 'input window, operand 0, single buffered']
    #allocation3 [shape = 's32[1]{0}', space=sflag, size = 0x4, scoped, tag = 'scoped memory for tpu_custom_call.1']
    #allocation4 [shape = 'u8[8192]{0}', space=vmem, size = 0x2000, scoped, tag = 'input window, operand 1, single buffered']
    #allocation5 [shape = 's32[1]{0}', space=sflag, size = 0x4, scoped, tag = 'scoped memory for tpu_custom_call.1']
    %12 = vsyncpa [#allocation3], 0
    %13 = vsyncpa [#allocation5], 0
    // Predicated region
    $region2: #{tpu_custom_call.1} parent=1 // pred_check
      _
    $region3: #{tpu_custom_call.1} parent=1 // pred_check_branch
      %15 = sbr.rel (0) target = $region5
    $region4: #{tpu_custom_call.1} parent=1 // pred_region
      %17 = vsyncadd [#allocation3], 0
      %s19 = sshll.u32 %s0, 4
      %s20 = int_to_ptr.hbm [resolvable:$true] %s19
      %s21 = sshll.u32 [#allocation2], 4
      %s22 = int_to_ptr.vmem [resolvable:$true] %s21
      %24 = dma.hbm_to_vmem [thread:$0]  %s20, 128, %s22, [#allocation3]
    $region5: #{tpu_custom_call.1} parent=1 // pred_fallthru
      _
    // Predicated region
    $region6: #{tpu_custom_call.1} parent=1 // pred_check
      _
    $region7: #{tpu_custom_call.1} parent=1 // pred_check_branch
      %26 = sbr.rel (0) target = $region9
    $region8: #{tpu_custom_call.1} parent=1 // pred_region
      %28 = vsyncadd [#allocation5], 0
      %s29 = sshll.u32 %s1, 4
      %s30 = int_to_ptr.hbm [resolvable:$true] %s29
      %s31 = sshll.u32 [#allocation4], 4
      %s32 = int_to_ptr.vmem [resolvable:$true] %s31
      %37 = dma.hbm_to_vmem [thread:$0]  %s30, 256, %s32, [#allocation5], 128, 128, 8
    $region9: #{tpu_custom_call.1} parent=1 // pred_fallthru
      _
    // Predicated region
    $region10: #{tpu_custom_call.1} parent=1 // pred_check
      _
    $region11: #{tpu_custom_call.1} parent=1 // pred_check_branch
      %39 = sbr.rel (0) target = $region13
    $region12: #{tpu_custom_call.1} parent=1 // pred_region
      _
    $region13: #{tpu_custom_call.1} parent=1 // pred_fallthru
      _
    // Predicated region
    $region14: #{tpu_custom_call.1} parent=1 // pred_check
      _
    $region15: #{tpu_custom_call.1} parent=1 // pred_check_branch
      %41 = sbr.rel (0) target = $region17
    $region16: #{tpu_custom_call.1} parent=1 // pred_region
      _
    $region17: #{tpu_custom_call.1} parent=1 // pred_fallthru
      _
    // Predicated region
    $region18: #{tpu_custom_call.1} parent=1 // pred_check
      _
    $region19: #{tpu_custom_call.1} parent=1 // pred_check_branch
      %43 = sbr.rel (0) target = $region21
    $region20: #{tpu_custom_call.1} parent=1 // pred_region
      _
    $region21: #{tpu_custom_call.1} parent=1 // pred_fallthru
      _
    // Predicated region
    $region22: #{tpu_custom_call.1} parent=1 // pred_check
      _
    $region23: #{tpu_custom_call.1} parent=1 // pred_check_branch
      %45 = sbr.rel (0) target = $region25
    $region24: #{tpu_custom_call.1} parent=1 // pred_region
      _
    $region25: #{tpu_custom_call.1} parent=1 // pred_fallthru
      _
    // Predicated region
    $region26: #{tpu_custom_call.1} parent=1 // pred_check
      _
    $region27: #{tpu_custom_call.1} parent=1 // pred_check_branch
      %47 = sbr.rel (0) target = $region29
    $region28: #{tpu_custom_call.1} parent=1 // pred_region
      _
    $region29: #{tpu_custom_call.1} parent=1 // pred_fallthru
      _
    // Predicated region
    $region30: #{tpu_custom_call.1} parent=1 // pred_check
      _
    $region31: #{tpu_custom_call.1} parent=1 // pred_check_branch
      %49 = sbr.rel (0) target = $region33
    $region32: #{tpu_custom_call.1} parent=1 // pred_region
      %51 = dma.done [#allocation3], 128
    $region33: #{tpu_custom_call.1} parent=1 // pred_fallthru
      _
    // Predicated region
    $region34: #{tpu_custom_call.1} parent=1 // pred_check
      _
    $region35: #{tpu_custom_call.1} parent=1 // pred_check_branch
      %53 = sbr.rel (0) target = $region37
    $region36: #{tpu_custom_call.1} parent=1 // pred_region
      %55 = dma.done [#allocation5], 256
    $region37: #{tpu_custom_call.1} parent=1 // pred_fallthru
      _
    %v56 = vld [vmem:[#allocation2] sm:$0xff]
    %v57 = vld [vmem:[#allocation4] sm:$0xff]
    %v58 = vld [vmem:[#allocation4 + $0x8] sm:$0xff]
    %v59 = vld [vmem:[%s2] sm:$0x1]
    %v61 = vperm.slane %v59, 0
    %vm63 = vcmask 130048
    %v65 = vsel %vm63, %v56, 0
    %67 = vmatpush.msra.mxu0 0.0
    %68 = vmatpush.msra.mxu0 0.0
    %69 = vmatpush.msra.mxu0 0.0
    %70 = vmatpush.msra.mxu0 0.0
    %71 = vmatpush.msra.mxu0 0.0
    %72 = vmatpush.msra.mxu0 0.0
    %73 = vmatpush.msra.mxu0 0.0
    %74 = vmatpush.msra.mxu0 0.0
    %75 = vmatpush.msra.mxu0 0.0
    %76 = vmatpush.msra.mxu0 0.0
    %77 = vmatpush.msra.mxu0 0.0
    %78 = vmatpush.msra.mxu0 0.0
    %79 = vmatpush.msra.mxu0 0.0
    %80 = vmatpush.msra.mxu0 0.0
    %81 = vmatpush.msra.mxu0 %v58
    %82 = vmatpush.msra.mxu0 %v57
    %83 = vmatmul.f32.gmra.mxu0 %v65
    %v84 = vpop.f32.mrf.mxu0
    %v85 = vadd.f32 %v61, %v84
    %86 = vdwg.mxu0
    %v87 = vmax.f32 %v85, 0.0
    %v88 = vld [vmem:[%s3] sm:$0xff]
    %v89 = vld [vmem:[%s3 + $0x8] sm:$0xff]
    %v90 = vld [vmem:[%s3 + $0x10] sm:$0xff]
    %v91 = vld [vmem:[%s3 + $0x18] sm:$0xff]
    %v92 = vld [vmem:[%s4] sm:$0x1]
    %v94 = vperm.slane %v92, 0
    %vm96 = vcmask 261120
    %v98 = vsel %vm96, %v87, 0
    %100 = vmatpush.msra.mxu0 0.0
    %101 = vmatpush.msra.mxu0 0.0
    %102 = vmatpush.msra.mxu0 0.0
    %103 = vmatpush.msra.mxu0 0.0
    %104 = vmatpush.msra.mxu0 0.0
    %105 = vmatpush.msra.mxu0 0.0
    %106 = vmatpush.msra.mxu0 0.0
    %107 = vmatpush.msra.mxu0 0.0
    %108 = vmatpush.msra.mxu0 0.0
    %109 = vmatpush.msra.mxu0 0.0
    %110 = vmatpush.msra.mxu0 0.0
    %111 = vmatpush.msra.mxu0 0.0
    %112 = vmatpush.msra.mxu0 %v91
    %113 = vmatpush.msra.mxu0 %v90
    %114 = vmatpush.msra.mxu0 %v89
    %115 = vmatpush.msra.mxu0 %v88
    %116 = vmatmul.f32.gmra.mxu0 %v98
    %v117 = vpop.f32.mrf.mxu0
    %v118 = vadd.f32 %v94, %v117
    %119 = vdwg.mxu0
    %v120 = vmax.f32 %v118, 0.0
    %v121 = vld [vmem:[%s5] sm:$0xff]
    %v122 = vld [vmem:[%s5 + $0x8] sm:$0xff]
    %v123 = vld [vmem:[%s5 + $0x10] sm:$0xff]
    %v124 = vld [vmem:[%s5 + $0x18] sm:$0xff]
    %v125 = vld [vmem:[%s6] sm:$0x1]
    %v127 = vperm.slane %v125, 0
    %v130 = vsel %vm96, %v120, 0
    %132 = vmatpush.msra.mxu0 0.0
    %133 = vmatpush.msra.mxu0 0.0
    %134 = vmatpush.msra.mxu0 0.0
    %135 = vmatpush.msra.mxu0 0.0
    %136 = vmatpush.msra.mxu0 0.0
    %137 = vmatpush.msra.mxu0 0.0
    %138 = vmatpush.msra.mxu0 0.0
    %139 = vmatpush.msra.mxu0 0.0
    %140 = vmatpush.msra.mxu0 0.0
    %141 = vmatpush.msra.mxu0 0.0
    %142 = vmatpush.msra.mxu0 0.0
    %143 = vmatpush.msra.mxu0 0.0
    %144 = vmatpush.msra.mxu0 %v124
    %145 = vmatpush.msra.mxu0 %v123
    %146 = vmatpush.msra.mxu0 %v122
    %147 = vmatpush.msra.mxu0 %v121
    %148 = vmatmul.f32.gmra.mxu0 %v130
    %v149 = vpop.f32.mrf.mxu0
    %v150 = vadd.f32 %v127, %v149
    %151 = vdwg.mxu0
    %vm152 = vcmask 31744
    %153 = vst.msk [vmem:[%s7] sm:$0xff] %vm152, %v150
    // Predicated region
    $region38: #{tpu_custom_call.1} parent=1 // pred_check
      _
    $region39: #{tpu_custom_call.1} parent=1 // pred_check_branch
      %155 = sbr.rel (0) target = $region41
    $region40: #{tpu_custom_call.1} parent=1 // pred_region
      _
    $region41: #{tpu_custom_call.1} parent=1 // pred_fallthru
      _
    // Predicated region
    $region42: #{tpu_custom_call.1} parent=1 // pred_check
      _
    $region43: #{tpu_custom_call.1} parent=1 // pred_check_branch
      %157 = sbr.rel (0) target = $region45
    $region44: #{tpu_custom_call.1} parent=1 // pred_region
      _
    $region45: #{tpu_custom_call.1} parent=1 // pred_fallthru
      _
    %158 = vsyncpa [#allocation3], 1
    %159 = vsyncpa [#allocation5], 1

</llo_original>
